<compile_context>
chip_gen: v5e
topology: v5e:2x2
jax: 0.10.0
libtpu: 0.0.40
codegen_flags: <defaults>
</compile_context>

<pallas_src>
import functools

import jax
import jax.numpy as jnp
from jax import lax
from jax.experimental import pallas as pl
from jax.experimental.pallas import tpu as pltpu

_LANE = 128
_SUBLANE = 8


def _chip_kind():
    try:
        return jax.devices()[0].device_kind.lower()
    except Exception:  # defensive: unknown backend -> conservative defaults
        return ""


def _pick_tile(total, target, align=_SUBLANE):
    """Largest divisor-of-`total` tile <= target that is a multiple of `align`
    (or `total` itself when total <= align). Prefers >= 2 blocks so the
    pipeline double-buffers and megacore has work to shard."""
    if total <= align:
        return total
    tile = min(target, total)
    tile -= tile % align
    while tile > align and total % tile != 0:
        tile -= align
    if total % tile != 0:
        tile = total
    if tile == total and total >= 2 * align and (total // 2) % align == 0:
        tile = total // 2
    return tile


def make_fused_qkv_weight(w_key, w_query, w_value):
    """Fuse the three (C, H) projection weights into one lane-padded bf16
    (C, 3*Hp) matrix laid out as [ Q | K | V ] (each slot zero-padded to Hp).
    Build this ONCE outside the per-call path."""
    C, H = w_key.shape
    Hp = ((H + _LANE - 1) // _LANE) * _LANE
    w = jnp.zeros((C, 3 * Hp), jnp.float32)
    w = w.at[:, 0 * Hp:0 * Hp + H].set(w_query)
    w = w.at[:, 1 * Hp:1 * Hp + H].set(w_key)
    w = w.at[:, 2 * Hp:2 * Hp + H].set(w_value)
    return w.astype(jnp.bfloat16)


def _qkv_proj_kernel(x_ref, w_ref, qkv_ref):
    """x_ref: (tr, C) f32, w_ref: (C, 3*Hp) bf16, qkv_ref: (tr, 3*Hp) bf16."""
    x = x_ref[...].astype(jnp.bfloat16)   # in-kernel cast hides under the matmul
    qkv_ref[...] = jnp.dot(x, w_ref[...],
                           preferred_element_type=jnp.float32).astype(qkv_ref.dtype)


def _flash_attn_kernel(q_ref, k_ref, v_ref, o_ref, m_sc, l_sc, acc_sc, *,
                       head_size, exp_dtype):
    """One (batch_block, q_tile, kv_tile) step of causal flash attention.

    q_ref: (bb, tq, Hp) bf16   k_ref/v_ref: (bb, tk, Hp) bf16
    o_ref: (bb, tq, Hp) bf16 (written only at the last kv tile)
    m_sc/l_sc: (bb, tq, 1) f32   acc_sc: (bb, tq, Hp) f32
    """
    qi = pl.program_id(1)
    ki = pl.program_id(2)
    tq = q_ref.shape[1]
    tk = k_ref.shape[1]
    q_start = qi * tq
    kv_start = ki * tk

    @pl.when(ki == 0)
    def _init():
        m_sc[...] = jnp.full_like(m_sc, -jnp.inf)
        l_sc[...] = jnp.zeros_like(l_sc)
        acc_sc[...] = jnp.zeros_like(acc_sc)

    # Skip kv tiles that lie strictly above the causal diagonal.
    @pl.when(kv_start <= q_start + tq - 1)
    def _compute():
        q = q_ref[...]
        k = k_ref[...]
        v = v_ref[...]
        scale = head_size ** -0.5
        # Contraction over the padded head dim (zero lanes contribute nothing).
        s = jnp.einsum("bqh,bkh->bqk", q, k,
                       preferred_element_type=jnp.float32) * scale   # (bb, tq, tk)

        # 2D causal mask, broadcast over the batch dim.
        rows = lax.broadcasted_iota(jnp.int32, (tq, tk), 0) + q_start
        cols = lax.broadcasted_iota(jnp.int32, (tq, tk), 1) + kv_start
        s = jnp.where(cols <= rows, s, -jnp.inf)

        m_prev = m_sc[...]
        m_new = jnp.maximum(m_prev, jnp.max(s, axis=-1, keepdims=True))
        alpha = jnp.exp(m_prev - m_new)                               # f32 rescale
        # exp in bf16 on v6e/v7x (bf16 EUP path), f32 on v5e; sum always in f32.
        e = jnp.exp((s - m_new).astype(exp_dtype))
        l_sc[...] = alpha * l_sc[...] + jnp.sum(e.astype(jnp.float32),
                                                axis=-1, keepdims=True)
        acc_sc[...] = alpha * acc_sc[...] + jnp.einsum(
            "bqk,bkh->bqh", e.astype(jnp.bfloat16), v,
            preferred_element_type=jnp.float32)
        m_sc[...] = m_new

    # Dropout on attention weights: eval-mode identity.

    @pl.when(ki == pl.num_programs(2) - 1)
    def _finalize():
        o_ref[...] = (acc_sc[...] *
                      pl.reciprocal(l_sc[...], approx=True)).astype(o_ref.dtype)


def head_forward(x, w_fused, head_size, *, q_tile=None, kv_tile=None,
                 return_padded=False):
    """x: (B, T, C) float32; w_fused: (C, 3*Hp) bf16 from make_fused_qkv_weight.

    Returns (B, T, head_size) in x.dtype (or the lane-padded (B, T, Hp) bf16
    slab when return_padded=True, for a downstream fused consumer).
    """
    B, T, C = x.shape
    assert w_fused.shape[0] == C and w_fused.shape[1] % (3 * _LANE) == 0
    Hp = w_fused.shape[1] // 3
    H = head_size
    assert T % _SUBLANE == 0, "context_window must be a multiple of 8"
    # TODO(synk): pad T to a multiple of 8 for arbitrary context windows.

    kind = _chip_kind()
    is_v7 = ("v7" in kind) or ("7x" in kind)
    # v5e has no bf16 VPU/EUP path -> keep softmax exp in f32 there.
    exp_dtype = jnp.bfloat16 if (is_v7 or ("v6" in kind)) else jnp.float32
    # v7x: 64 MiB physical VMEM -> tighter explicit scoped limit with headroom.
    vmem_limit = (32 if is_v7 else 64) * 1024 * 1024

    # -------- kernel 1: fused QKV projection -----------------------------
    rows = B * T
    row_tile = _pick_tile(rows, 256)
    x2d = x.reshape(rows, C)                     # metadata-only reshape, stays f32
    proj_cost = pl.CostEstimate(
        flops=2 * rows * C * 3 * Hp,
        transcendentals=0,
        bytes_accessed=rows * C * 4 + C * 3 * Hp * 2 + rows * 3 * Hp * 2)
    qkv2d = pl.pallas_call(
        _qkv_proj_kernel,
        out_shape=jax.ShapeDtypeStruct((rows, 3 * Hp), jnp.bfloat16),
        grid_spec=pltpu.PrefetchScalarGridSpec(
            num_scalar_prefetch=0,
            grid=(rows // row_tile,),
            in_specs=[
                pl.BlockSpec((row_tile, C), lambda r: (r, 0)),     # x rows (f32)
                # Constant-index weight block; pl.Buffered(1) pipeline_mode would
                # drop its pointless second VMEM buffer (left default for compat).
                pl.BlockSpec((C, 3 * Hp), lambda r: (0, 0)),
            ],
            out_specs=pl.BlockSpec((row_tile, 3 * Hp), lambda r: (r, 0)),
        ),
        compiler_params=pltpu.CompilerParams(
            dimension_semantics=("parallel",),
            vmem_limit_bytes=vmem_limit),
        cost_estimate=proj_cost,
    )(x2d, w_fused)
    qkv = qkv2d.reshape(B, T, 3 * Hp)            # metadata-only reshape

    # -------- kernel 2: flash attention ----------------------------------
    bb = 1                                       # B grid steps -> megacore sharding
    tq = q_tile or _pick_tile(T, 128)
    tk = kv_tile or _pick_tile(T, 128)
    n_q, n_kv = T // tq, T // tk

    kernel = functools.partial(_flash_attn_kernel, head_size=H,
                               exp_dtype=exp_dtype)
    attn_cost = pl.CostEstimate(
        flops=2 * 2 * B * T * T * Hp,            # QK^T + PV (pre-skip upper bound)
        transcendentals=B * T * T // 2,          # causal exp count
        bytes_accessed=3 * B * T * Hp * 2 * n_q + B * T * Hp * 2)

    out_padded = pl.pallas_call(
        kernel,
        out_shape=jax.ShapeDtypeStruct((B, T, Hp), jnp.bfloat16),
        grid_spec=pltpu.PrefetchScalarGridSpec(
            num_scalar_prefetch=0,
            grid=(B // bb, n_q, n_kv),
            in_specs=[
                pl.BlockSpec((bb, tq, Hp), lambda b, qi, ki: (b, qi, 0)),  # Q slot
                pl.BlockSpec((bb, tk, Hp), lambda b, qi, ki: (b, ki, 1)),  # K slot
                pl.BlockSpec((bb, tk, Hp), lambda b, qi, ki: (b, ki, 2)),  # V slot
            ],
            out_specs=pl.BlockSpec((bb, tq, Hp), lambda b, qi, ki: (b, qi, 0)),
            scratch_shapes=[
                pltpu.VMEM((bb, tq, 1), jnp.float32),    # m (running max)
                pltpu.VMEM((bb, tq, 1), jnp.float32),    # l (running denom)
                pltpu.VMEM((bb, tq, Hp), jnp.float32),   # acc (unnormalized P@V)
            ],
        ),
        compiler_params=pltpu.CompilerParams(
            dimension_semantics=("parallel", "parallel", "arbitrary"),
            vmem_limit_bytes=vmem_limit),
        cost_estimate=attn_cost,
    )(qkv, qkv, qkv)

    if return_padded:
        return out_padded                         # (B, T, Hp) bf16, lane-dense
    # Slice the real head columns; cast back to the module's output dtype.
    return out_padded[:, :, :H].astype(x.dtype)


def head_reference(x, w_key, w_query, w_value):
    """Pure-JAX f32 reference mirroring the PyTorch forward (eval mode)."""
    k = x @ w_key
    q = x @ w_query
    v = x @ w_value
    T = x.shape[1]
    wei = (q @ jnp.swapaxes(k, -2, -1)) * (k.shape[-1] ** -0.5)
    tril = jnp.tril(jnp.ones((T, T), dtype=bool))
    wei = jnp.where(tril, wei, -jnp.inf)
    wei = jax.nn.softmax(wei, axis=-1)
    return wei @ v


if __name__ == "__main__":
    # Module hyperparameters (small, consistent with the forward pass):
    batch = 2
    context_window = 8          # T
    model_dimension = 32        # C
    head_size = 16              # H
    # dropout probability irrelevant in eval mode

    key = jax.random.PRNGKey(0)
    kx, kk, kq, kv = jax.random.split(key, 4)

    x = jax.random.normal(kx, (batch, context_window, model_dimension),
                          dtype=jnp.float32)
    # Deterministic weight init (stand-in for torch's nn.Linear init),
    # stored as (C, H) = torch_weight.T
    w_key = jax.random.normal(kk, (model_dimension, head_size), jnp.float32) * 0.1
    w_query = jax.random.normal(kq, (model_dimension, head_size), jnp.float32) * 0.1
    w_value = jax.random.normal(kv, (model_dimension, head_size), jnp.float32) * 0.1

    # Fused lane-padded [Q|K|V] weight, built once (not per call).
    w_fused = make_fused_qkv_weight(w_key, w_query, w_value)

    out = head_forward(x, w_fused, head_size)
    out = jax.block_until_ready(out)

    ref = head_reference(x, w_key, w_query, w_value)
    assert out.shape == (batch, context_window, head_size)
    # bf16 MXU inputs / bf16 output vs. an f32 reference -> relaxed tolerance.
    assert jnp.allclose(out, ref, atol=5e-2, rtol=5e-2), "mismatch vs reference"

    print("KERNEL_OK")
</pallas_src>

<mosaic_0001>
module attributes {stable_mosaic.version = 11 : i64} {
  func.func @_qkv_proj_kernel(%arg0: i32, %arg1: memref<8x32xf32, #tpu.memory_space<vmem>>, %arg2: memref<32x384xbf16, #tpu.memory_space<vmem>>, %arg3: memref<8x384xbf16, #tpu.memory_space<vmem>>) attributes {dimension_semantics = [#tpu.dimension_semantics<parallel>], iteration_bounds = array<i64: 2>, scalar_prefetch = 0 : i64, scratch_operands = 0 : i64, tpu.core_type = #tpu.core_type<tc>, window_params = [{transform_indices = @transform_0, window_bounds = array<i64: 8, 32>}, {pipeline_mode = #tpu.pipeline_mode<synchronous>, transform_indices = @transform_1, window_bounds = array<i64: 32, 384>}, {transform_indices = @transform_2, window_bounds = array<i64: 8, 384>}]} {
    %c0 = arith.constant 0 : index
    %c0_0 = arith.constant 0 : index
    %0 = vector.load %arg1[%c0, %c0_0] : memref<8x32xf32, #tpu.memory_space<vmem>>, vector<8x32xf32>
    %1 = arith.truncf %0 : vector<8x32xf32> to vector<8x32xbf16>
    %c0_1 = arith.constant 0 : index
    %c0_2 = arith.constant 0 : index
    %2 = vector.load %arg2[%c0_1, %c0_2] : memref<32x384xbf16, #tpu.memory_space<vmem>>, vector<32x384xbf16>
    %cst = arith.constant dense<0.000000e+00> : vector<8x384xf32>
    %3 = tpu.matmul %1, %2, %cst {dimension_numbers = #tpu.dot_dimension_numbers<[1], [0], [0], [1], [0, 0, 1, 1], [], []>} : vector<8x32xbf16>, vector<32x384xbf16>, vector<8x384xf32> -> vector<8x384xf32>
    %4 = arith.truncf %3 : vector<8x384xf32> to vector<8x384xbf16>
    %c0_3 = arith.constant 0 : index
    %c0_4 = arith.constant 0 : index
    %5 = vector.load %arg3[%c0_3, %c0_4] : memref<8x384xbf16, #tpu.memory_space<vmem>>, vector<8x384xbf16>
    tpu.vector_store %arg3[%c0_3, %c0_4], %4 {strides = array<i32>} : memref<8x384xbf16, #tpu.memory_space<vmem>>, vector<8x384xbf16>,
    return
  }
  func.func @transform_0(%arg0: i32) -> (i32, i32) {
    %c0_i32 = arith.constant 0 : i32
    %c0_i32_0 = arith.constant 0 : i32
    return %arg0, %c0_i32 : i32, i32
  }
  func.func @transform_1(%arg0: i32) -> (i32, i32) {
    %c0_i32 = arith.constant 0 : i32
    %c0_i32_0 = arith.constant 0 : i32
    %c0_i32_1 = arith.constant 0 : i32
    return %c0_i32, %c0_i32_0 : i32, i32
  }
  func.func @transform_2(%arg0: i32) -> (i32, i32) {
    %c0_i32 = arith.constant 0 : i32
    %c0_i32_0 = arith.constant 0 : i32
    return %arg0, %c0_i32 : i32, i32
  }
}

</mosaic_0001>

<llo_original>
// kernel: tpu_custom_call.1
$region0: #{tpu_custom_call.1}
  #allocation0 [shape = 'u32[]', space=smem, size = 0x4, offset = 0x4, fixed_abs, tag = 'smem constant byte address 0x4 - core index']
  #allocation1 [shape = 'u32[72,128]{1,0:T(1,128)}', space=vmem, size = 0x9000, scoped, tag = 'internal scratch']
  %s0 = inlined_call_operand.hbm [shape: f32[16,32], index: 0, kind: input, shape index: {}]
  %s1 = inlined_call_operand.hbm [shape: bf16[32,384], index: 1, kind: input, shape index: {}]
  %s2 = inlined_call_operand.hbm [shape: bf16[16,384], index: 2, kind: output, shape index: {}]
  %s3 = sld [smem:[#allocation0]]
  $region49: #{tpu_custom_call.1} parent=0
    _
  %s5 = ssub.s32 1, %s3
  %s6 = scalar_select 0, %s5, %s3
  $region1: #{tpu_custom_call.1} parent=0
    #allocation2 [shape = 'u8[8192]{0}', space=vmem, size = 0x2000, scoped, tag = 'input window, operand 0']
    #allocation3 [shape = 's32[2]{0}', space=sflag, size = 0x8, scoped, tag = 'scoped memory for tpu_custom_call.1']
    #allocation4 [shape = 's32[2]{0}', space=sflag, size = 0x8, scoped, tag = 'scoped memory for tpu_custom_call.1']
    #allocation5 [shape = 'u8[24576]{0}', space=vmem, size = 0x6000, scoped, tag = 'input window, operand 1, single buffered']
    #allocation6 [shape = 's32[1]{0}', space=sflag, size = 0x4, scoped, tag = 'scoped memory for tpu_custom_call.1']
    #allocation7 [shape = 'u8[12288]{0}', space=vmem, size = 0x3000, scoped, tag = 'output window, operand 0']
    %7 = vsyncpa [#allocation3], 0
    %s8 = scalar_lea.sflag [#allocation3], 1
    %9 = vsyncpa %s8, 0
    %10 = vsyncpa [#allocation6], 0
    %11 = vsyncpa [#allocation4], 0
    %s12 = scalar_lea.sflag [#allocation4], 1
    %13 = vsyncpa %s12, 0
    loop: start=0, step=1, limit=4
    $region2: #{tpu_custom_call.1} parent=1 // loop_pre_header
      _
    $region3: #{tpu_custom_call.1} parent=1 // loop_header
      %s15 = sphi 0, %s19
      %p16 = scmp.ge.s32.totalorder %s15, 4
      %s25 = sphi 0, %s27
      %s28 = sphi 0, %s25
      %s29 = sphi 0, %s28
      %s45 = sphi 0, %s29
      %s49 = sphi 0, %s49
      %s51 = sphi 0, %s49
      %s52 = sphi 0, %s51
      %s66 = sphi 0, %s52
      %s72 = sphi 0, %s74
      %s75 = sphi 0, %s72
      %s76 = sphi 0, %s75
      %s92 = sphi 0, %s76
    $region4: #{tpu_custom_call.1} parent=1 // loop_header_branch
      %18 = sbr.rel (%p16) target = $region8
    $region5: #{tpu_custom_call.1} parent=1 // loop_body
      %s20 = ssub.s32 %s15, 1
      %s21 = ssub.s32 %s15, 2
      %s22 = sadd.s32 %s15, 1
      %s23 = ssub.s32 %s15, %s22
      %p24 = scmp.eq.s32.totalorder %s23, 0
      %s26 = sadd.s32 %s25, 1
      %s27 = scalar_select %p24, %s25, %s26
      %p30 = pneg %p24
      %p31 = scmp.eq.s32.totalorder %s15, 1
      %p32 = por %p30, %p31
      %p33 = scmp.ne.s32.totalorder %s25, %s28
      %p34 = scmp.eq.s32.totalorder %s15, 0
      %p35 = por %p33, %p34
      %p36 = scmp.ne.s32.totalorder %s25, %s28
      %p37 = scmp.eq.s32.totalorder %s20, 1
      %p38 = por %p36, %p37
      %p39 = scmp.ne.s32.totalorder %s28, %s29
      %p40 = scmp.eq.s32.totalorder %s20, 0
      %p41 = por %p39, %p40
      %p42 = scmp.ne.s32.totalorder %s28, %s29
      %p43 = scmp.eq.s32.totalorder %s21, 1
      %p44 = por %p42, %p43
      %p46 = scmp.ne.s32.totalorder %s29, %s45
      %p47 = scmp.eq.s32.totalorder %s21, 0
      %p48 = por %p46, %p47
      %s50 = sadd.s32 %s49, 1
      %p53 = scmp.eq.s32.totalorder %s15, 1
      %p54 = scmp.ne.s32.totalorder %s49, %s51
      %p55 = scmp.eq.s32.totalorder %s15, 0
      %p56 = por %p54, %p55
      %p57 = scmp.ne.s32.totalorder %s49, %s51
      %p58 = scmp.eq.s32.totalorder %s20, 1
      %p59 = por %p57, %p58
      %p60 = scmp.ne.s32.totalorder %s51, %s52
      %p61 = scmp.eq.s32.totalorder %s20, 0
      %p62 = por %p60, %p61
      %p63 = scmp.ne.s32.totalorder %s51, %s52
      %p64 = scmp.eq.s32.totalorder %s21, 1
      %p65 = por %p63, %p64
      %p67 = scmp.ne.s32.totalorder %s52, %s66
      %p68 = scmp.eq.s32.totalorder %s21, 0
      %p69 = por %p67, %p68
      %s70 = ssub.s32 %s15, %s22
      %p71 = scmp.eq.s32.totalorder %s70, 0
      %s73 = sadd.s32 %s72, 1
      %s74 = scalar_select %p71, %s72, %s73
      %p77 = pneg %p71
      %p78 = scmp.eq.s32.totalorder %s15, 1
      %p79 = por %p77, %p78
      %p80 = scmp.ne.s32.totalorder %s72, %s75
      %p81 = scmp.eq.s32.totalorder %s15, 0
      %p82 = por %p80, %p81
      %p83 = scmp.ne.s32.totalorder %s72, %s75
      %p84 = scmp.eq.s32.totalorder %s20, 1
      %p85 = por %p83, %p84
      %p86 = scmp.ne.s32.totalorder %s75, %s76
      %p87 = scmp.eq.s32.totalorder %s20, 0
      %p88 = por %p86, %p87
      %p89 = scmp.ne.s32.totalorder %s75, %s76
      %p90 = scmp.eq.s32.totalorder %s21, 1
      %p91 = por %p89, %p90
      %p93 = scmp.ne.s32.totalorder %s76, %s92
      %p94 = scmp.eq.s32.totalorder %s21, 0
      %p95 = por %p93, %p94
      %p96 = scmp.le.s32.totalorder 1, %s15
      %p97 = scmp.lt.s32.totalorder %s15, 3
      %p98 = pnand %p96, %p97
      %p99 = pneg %p98
      // Predicated region
      $region9: #{tpu_custom_call.1} parent=5 // pred_check
        _
      $region10: #{tpu_custom_call.1} parent=5 // pred_check_branch
        %101 = sbr.rel (%p98) target = $region12
      $region11: #{tpu_custom_call.1} parent=5 // pred_region
        %s102 = ssub.s32 %s15, 1
        // Predicated region
        $region13: #{tpu_custom_call.1} parent=11 // pred_check
          %p103 = pneg %p62
        $region14: #{tpu_custom_call.1} parent=11 // pred_check_branch
          %105 = sbr.rel (%p103) target = $region16
        $region15: #{tpu_custom_call.1} parent=11 // pred_region
          %107 = vsyncadd [#allocation6], 0
          %s108 = sshll.u32 %s1, 4
          %s109 = int_to_ptr.hbm [resolvable:$true] %s108
          %s110 = sshll.u32 [#allocation5], 4
          %s111 = int_to_ptr.vmem [resolvable:$true] %s110
          %116 = dma.hbm_to_vmem [thread:$0]  %s109, 768, %s111, [#allocation6], 192, 192, 12
        $region16: #{tpu_custom_call.1} parent=11 // pred_fallthru
          _
      $region12: #{tpu_custom_call.1} parent=5 // pred_fallthru
        _
      %p117 = scmp.lt.s32.totalorder %s15, 2
      // Predicated region
      $region17: #{tpu_custom_call.1} parent=5 // pred_check
        %p118 = pneg %p117
      $region18: #{tpu_custom_call.1} parent=5 // pred_check_branch
        %120 = sbr.rel (%p118) target = $region20
      $region19: #{tpu_custom_call.1} parent=5 // pred_region
        // Predicated region
        $region21: #{tpu_custom_call.1} parent=19 // pred_check
          %p121 = pneg %p35
        $region22: #{tpu_custom_call.1} parent=19 // pred_check_branch
          %123 = sbr.rel (%p121) target = $region24
        $region23: #{tpu_custom_call.1} parent=19 // pred_region
          %s124 = sand.u32 %s25, 1
          %s125 = scalar_lea.sflag [#allocation3], %s124
          %s126 = sand.u32 %s25, 1
          %s127 = smul.addr %s126, 8
          %s128 = scalar_lea.vmem [#allocation2], %s127
          %130 = vsyncadd %s125, 0
          %s131 = smul.addr %s15, 8
          %s132 = scalar_lea.hbm %s0, %s131
          %s134 = sshll.u32 %s132, 4
          %s135 = int_to_ptr.hbm [resolvable:$true] %s134
          %s136 = sshll.u32 %s128, 4
          %s137 = int_to_ptr.vmem [resolvable:$true] %s136
          %139 = dma.hbm_to_vmem [thread:$0]  %s135, 128, %s137, %s125
        $region24: #{tpu_custom_call.1} parent=19 // pred_fallthru
          _
      $region20: #{tpu_custom_call.1} parent=5 // pred_fallthru
        _
      %p140 = scmp.le.s32.totalorder 1, %s15
      %p141 = scmp.lt.s32.totalorder %s15, 3
      %p142 = pnand %p140, %p141
      %p143 = pneg %p142
      // Predicated region
      $region25: #{tpu_custom_call.1} parent=5 // pred_check
        _
      $region26: #{tpu_custom_call.1} parent=5 // pred_check_branch
        %145 = sbr.rel (%p142) target = $region28
      $region27: #{tpu_custom_call.1} parent=5 // pred_region
        %s146 = ssub.s32 %s15, 1
        %s147 = sand.u32 %s28, 1
        %s148 = scalar_lea.sflag [#allocation3], %s147
        %s149 = sand.u32 %s28, 1
        %s150 = smul.addr %s149, 8
        %s151 = scalar_lea.vmem [#allocation2], %s150
        // Predicated region
        $region29: #{tpu_custom_call.1} parent=27 // pred_check
          %p152 = pneg %p41
        $region30: #{tpu_custom_call.1} parent=27 // pred_check_branch
          %154 = sbr.rel (%p152) target = $region32
        $region31: #{tpu_custom_call.1} parent=27 // pred_region
          %156 = dma.done %s148, 128
        $region32: #{tpu_custom_call.1} parent=27 // pred_fallthru
          _
        // Predicated region
        $region33: #{tpu_custom_call.1} parent=27 // pred_check
          %p157 = pneg %p62
        $region34: #{tpu_custom_call.1} parent=27 // pred_check_branch
          %159 = sbr.rel (%p157) target = $region36
        $region35: #{tpu_custom_call.1} parent=27 // pred_region
          %161 = dma.done [#allocation6], 768
        $region36: #{tpu_custom_call.1} parent=27 // pred_fallthru
          _
        %s162 = sand.u32 %s28, 1
        %s163 = scalar_lea.sflag [#allocation3], %s162
        %s164 = sand.u32 %s28, 1
        %s165 = smul.addr %s164, 8
        %s166 = scalar_lea.vmem [#allocation2], %s165
        %p167 = pneg %p41
        %p168 = pneg %p38
        %p169 = pneg %p62
        %p170 = pneg %p59
        %p171 = pneg %p88
        %p172 = pneg %p85
        %s173 = sand.u32 %s75, 1
        %s174 = scalar_lea.sflag [#allocation4], %s173
        %s175 = sand.u32 %s75, 1
        %s176 = smul.addr %s175, 12
        %s177 = scalar_lea.vmem [#allocation7], %s176
        %v179 = vld [vmem:[%s151] sm:$0xff]
        %v180 = vpack.c.bf16 %v179, %v179
        %v181 = vld [vmem:[#allocation5] sm:$0xff]
        %v182 = vld [vmem:[#allocation5 + $0x8] sm:$0xf]
        %v183 = vld [vmem:[#allocation5 + $0xc] sm:$0xff]
        %v184 = vld [vmem:[#allocation5 + $0x14] sm:$0xf]
        %v185 = vld [vmem:[#allocation5 + $0x18] sm:$0xff]
        %v186 = vld [vmem:[#allocation5 + $0x20] sm:$0xf]
        %v187 = vld [vmem:[#allocation5 + $0x24] sm:$0xff]
        %v188 = vld [vmem:[#allocation5 + $0x2c] sm:$0xf]
        %v197 = vunpack.c.l.b16 %v181
        %v198 = vunpack.c.h.b16 %v181
        %v199 = vunpack.c.l.b16 %v182
        %v200 = vunpack.c.l.b16 %v183
        %v201 = vunpack.c.h.b16 %v183
        %v202 = vunpack.c.l.b16 %v184
        %v203 = vunpack.c.l.b16 %v185
        %v204 = vunpack.c.h.b16 %v185
        %v205 = vunpack.c.l.b16 %v186
        %v206 = vunpack.c.l.b16 %v187
        %v207 = vunpack.c.h.b16 %v187
        %v208 = vunpack.c.l.b16 %v188
        %v209 = vpack.c.b16 %v200, %v197
        %v210 = vpack.c.b16 %v201, %v198
        %v211 = vpack.c.b16 %v202, %v199
        %v212 = vpack.c.b16 %v206, %v203
        %v213 = vpack.c.b16 %v207, %v204
        %v214 = vpack.c.b16 %v208, %v205
        %vm221 = vcmask 261120
        %v223 = vsel %vm221, %v180, 0
        %225 = vmatpush.bf16.msra.mxu0 0
        %226 = vmatpush.bf16.msra.mxu0 0
        %227 = vmatpush.bf16.msra.mxu0 0
        %228 = vmatpush.bf16.msra.mxu0 0
        %229 = vmatpush.bf16.msra.mxu0 0
        %230 = vmatpush.bf16.msra.mxu0 0
        %231 = vmatpush.bf16.msra.mxu0 %v212
        %232 = vmatpush.bf16.msra.mxu0 %v209
        %233 = vmatmul.bf16.gmra.mxu0 %v223
        %v234 = vpop.f32.mrf.mxu0
        %v235 = vadd.f32 0.0, %v234
        %v236 = vpop.f32.mrf.mxu0
        %237 = vdwg.mxu0
        %238 = vmatpush.bf16.msra.mxu0 0
        %239 = vmatpush.bf16.msra.mxu0 0
        %240 = vmatpush.bf16.msra.mxu0 0
        %241 = vmatpush.bf16.msra.mxu0 0
        %242 = vmatpush.bf16.msra.mxu0 0
        %243 = vmatpush.bf16.msra.mxu0 0
        %244 = vmatpush.bf16.msra.mxu0 %v213
        %245 = vmatpush.bf16.msra.mxu0 %v210
        %246 = vmatmul.bf16.gmra.mxu0 %v223
        %v247 = vpop.f32.mrf.mxu0
        %v248 = vadd.f32 0.0, %v247
        %v249 = vpop.f32.mrf.mxu0
        %250 = vdwg.mxu0
        %251 = vmatpush.bf16.msra.mxu0 0
        %252 = vmatpush.bf16.msra.mxu0 0
        %253 = vmatpush.bf16.msra.mxu0 0
        %254 = vmatpush.bf16.msra.mxu0 0
        %255 = vmatpush.bf16.msra.mxu0 0
        %256 = vmatpush.bf16.msra.mxu0 0
        %257 = vmatpush.bf16.msra.mxu0 %v214
        %258 = vmatpush.bf16.msra.mxu0 %v211
        %259 = vmatmul.bf16.gmra.mxu0 %v223
        %v260 = vpop.f32.mrf.mxu0
        %v261 = vadd.f32 0.0, %v260
        %v262 = vpop.f32.mrf.mxu0
        %263 = vdwg.mxu0
        %v264 = vpack.c.bf16 %v248, %v235
        %v265 = vpack.c.bf16 %v261, %v261
        %266 = vst [vmem:[%s177] sm:$0xff] %v264
        %267 = vst [vmem:[%s177 + $0x8] sm:$0xf] %v265
        %s268 = sand.u32 %s75, 1
        %s269 = scalar_lea.sflag [#allocation4], %s268
        %s270 = sand.u32 %s75, 1
        %s271 = smul.addr %s270, 12
        %s272 = scalar_lea.vmem [#allocation7], %s271
        // Predicated region
        $region37: #{tpu_custom_call.1} parent=27 // pred_check
          %p273 = pneg %p85
        $region38: #{tpu_custom_call.1} parent=27 // pred_check_branch
          %275 = sbr.rel (%p273) target = $region40
        $region39: #{tpu_custom_call.1} parent=27 // pred_region
          %277 = vsyncadd %s269, 0
          %s278 = smul.addr %s20, 3
          %s279 = smul.addr %s278, 4
          %s280 = scalar_lea.hbm %s2, %s279
          %s282 = sshll.u32 %s272, 4
          %s283 = int_to_ptr.vmem [resolvable:$true] %s282
          %s284 = sshll.u32 %s280, 4
          %s285 = int_to_ptr.hbm [resolvable:$true] %s284
          %287 = dma.vmem_to_hbm [thread:$0]  %s283, 192, %s285, %s269
        $region40: #{tpu_custom_call.1} parent=27 // pred_fallthru
          _
      $region28: #{tpu_custom_call.1} parent=5 // pred_fallthru
        _
      %p288 = scmp.le.s32.totalorder 2, %s15
      // Predicated region
      $region41: #{tpu_custom_call.1} parent=5 // pred_check
        %p289 = pneg %p288
      $region42: #{tpu_custom_call.1} parent=5 // pred_check_branch
        %291 = sbr.rel (%p289) target = $region44
      $region43: #{tpu_custom_call.1} parent=5 // pred_region
        %s292 = ssub.s32 %s15, 2
        // Predicated region
        $region45: #{tpu_custom_call.1} parent=43 // pred_check
          %p293 = pneg %p91
        $region46: #{tpu_custom_call.1} parent=43 // pred_check_branch
          %295 = sbr.rel (%p293) target = $region48
        $region47: #{tpu_custom_call.1} parent=43 // pred_region
          %s296 = sand.u32 %s76, 1
          %s297 = scalar_lea.sflag [#allocation4], %s296
          %s298 = sand.u32 %s76, 1
          %s299 = smul.addr %s298, 12
          %s300 = scalar_lea.vmem [#allocation7], %s299
          %302 = dma.done %s297, 192
        $region48: #{tpu_custom_call.1} parent=43 // pred_fallthru
          _
      $region44: #{tpu_custom_call.1} parent=5 // pred_fallthru
        _
    $region6: #{tpu_custom_call.1} parent=1 // loop_footer
      %s19 = sadd.s32 1, %s15
    $region7: #{tpu_custom_call.1} parent=1 // loop_footer_branch
      %14 = sbr.rel target = $region3
    $region8: #{tpu_custom_call.1} parent=1 // loop_exit
      _
    %303 = vsyncpa [#allocation3], 1
    %s304 = scalar_lea.sflag [#allocation3], 1
    %305 = vsyncpa %s304, 1
    %306 = vsyncpa [#allocation6], 1
    %307 = vsyncpa [#allocation4], 1
    %s308 = scalar_lea.sflag [#allocation4], 1
    %309 = vsyncpa %s308, 1

</llo_original>
